<compile_context>
chip_gen: v7x
topology: tpu7x:2x2x1
jax: 0.10.0
libtpu: 0.0.40
codegen_flags: <defaults>
</compile_context>

<pallas_src>
import math

import jax
import jax.numpy as jnp
from jax.experimental import pallas as pl
from jax.experimental.pallas import tpu as pltpu

_SQRT_2_OVER_PI = math.sqrt(2.0 / math.pi)
_LANE = 128          # lane-dense last dim (multiple of 128 -> unmasked stores)
_MAX_BLOCK_ROWS = 1024   # 1024 x 128 x 4B = 512 KiB per buffer; fits VMEM easily


def _gelu_kernel(x_ref, o_ref):
    x = x_ref[...]                                   # (rows_block, 128) f32
    # tanh-approx GELU: 0.5*x*(1 + tanh(sqrt(2/pi)*(x + 0.044715*x^3)))
    inner = _SQRT_2_OVER_PI * (x * (1.0 + 0.044715 * (x * x)))   # fma-friendly
    o_ref[...] = 0.5 * x * (1.0 + jnp.tanh(inner))   # tanh -> EUP slot


def _round_up(n, m):
    return ((n + m - 1) // m) * m


def pallas_gelu(x):
    """Elementwise GELU via a single lane-dense Pallas kernel."""
    orig_shape = x.shape
    orig_dtype = x.dtype

    n = x.size
    rows_needed = pl.cdiv(n, _LANE)
    rows_block = min(_MAX_BLOCK_ROWS, _round_up(rows_needed, 8))
    rows_total = _round_up(rows_needed, rows_block)
    n_pad = rows_total * _LANE

    xf = jnp.ravel(x).astype(jnp.float32)
    if n_pad != n:
        xf = jnp.pad(xf, (0, n_pad - n))
    x2 = xf.reshape(rows_total, _LANE)               # (rows_total, 128) lane-dense

    grid = (rows_total // rows_block,)               # = (1,) at toy sizes

    out = pl.pallas_call(
        _gelu_kernel,
        out_shape=jax.ShapeDtypeStruct((rows_total, _LANE), jnp.float32),
        grid=grid,
        in_specs=[pl.BlockSpec((rows_block, _LANE), lambda i: (i, 0))],
        out_specs=pl.BlockSpec((rows_block, _LANE), lambda i: (i, 0)),
        compiler_params=pltpu.CompilerParams(
            dimension_semantics=("parallel",)),
    )(x2)

    out = out.reshape(-1)[:n].reshape(orig_shape)
    return out.astype(orig_dtype)


def _gelu_reference(x):
    xf = x.astype(jnp.float32)
    return (0.5 * xf * (1.0 + jnp.tanh(
        _SQRT_2_OVER_PI * (xf + 0.044715 * xf ** 3)))).astype(x.dtype)


if __name__ == "__main__":
    key = jax.random.PRNGKey(0)
    x = jax.random.normal(key, (2, 4, 16, 16), dtype=jnp.float32)

    y = pallas_gelu(x)
    y = jax.block_until_ready(y)

    y_ref = _gelu_reference(x)
    assert y.shape == x.shape
    assert bool(jnp.all(jnp.isfinite(y)))
    assert bool(jnp.allclose(y, y_ref, atol=1e-6, rtol=1e-6)), "mismatch vs reference"
    print("KERNEL_OK")
</pallas_src>

<mosaic_0001>
module attributes {stable_mosaic.version = 11 : i64} {
  func.func @_gelu_kernel(%arg0: i32, %arg1: memref<16x128xf32, #tpu.memory_space<vmem>>, %arg2: memref<16x128xf32, #tpu.memory_space<vmem>>) attributes {dimension_semantics = [#tpu.dimension_semantics<parallel>], iteration_bounds = array<i64: 1>, scalar_prefetch = 0 : i64, scratch_operands = 0 : i64, tpu.core_type = #tpu.core_type<tc>, window_params = [{transform_indices = @transform_0, window_bounds = array<i64: 16, 128>}, {transform_indices = @transform_1, window_bounds = array<i64: 16, 128>}]} {
    %c0 = arith.constant 0 : index
    %c0_0 = arith.constant 0 : index
    %0 = vector.load %arg1[%c0, %c0_0] : memref<16x128xf32, #tpu.memory_space<vmem>>, vector<16x128xf32>
    %1 = arith.mulf %0, %0 : vector<16x128xf32>
    %cst = arith.constant 4.471500e-02 : f32
    %2 = vector.broadcast %cst : f32 to vector<16x128xf32>
    %3 = arith.mulf %2, %1 : vector<16x128xf32>
    %cst_1 = arith.constant 1.000000e+00 : f32
    %4 = vector.broadcast %cst_1 : f32 to vector<16x128xf32>
    %5 = arith.addf %4, %3 : vector<16x128xf32>
    %6 = arith.mulf %0, %5 : vector<16x128xf32>
    %cst_2 = arith.constant 0.797884583 : f32
    %7 = vector.broadcast %cst_2 : f32 to vector<16x128xf32>
    %8 = arith.mulf %7, %6 : vector<16x128xf32>
    %cst_3 = arith.constant 5.000000e-01 : f32
    %9 = vector.broadcast %cst_3 : f32 to vector<16x128xf32>
    %10 = arith.mulf %9, %0 : vector<16x128xf32>
    %11 = math.tanh %8 : vector<16x128xf32>
    %cst_4 = arith.constant 1.000000e+00 : f32
    %12 = vector.broadcast %cst_4 : f32 to vector<16x128xf32>
    %13 = arith.addf %12, %11 : vector<16x128xf32>
    %14 = arith.mulf %10, %13 : vector<16x128xf32>
    %c0_5 = arith.constant 0 : index
    %c0_6 = arith.constant 0 : index
    %15 = vector.load %arg2[%c0_5, %c0_6] : memref<16x128xf32, #tpu.memory_space<vmem>>, vector<16x128xf32>
    tpu.vector_store %arg2[%c0_5, %c0_6], %14 {strides = array<i32>} : memref<16x128xf32, #tpu.memory_space<vmem>>, vector<16x128xf32>,
    return
  }
  func.func @transform_0(%arg0: i32) -> (i32, i32) {
    %c0_i32 = arith.constant 0 : i32
    %c0_i32_0 = arith.constant 0 : i32
    return %arg0, %c0_i32 : i32, i32
  }
  func.func @transform_1(%arg0: i32) -> (i32, i32) {
    %c0_i32 = arith.constant 0 : i32
    %c0_i32_0 = arith.constant 0 : i32
    return %arg0, %c0_i32 : i32, i32
  }
}

</mosaic_0001>

<llo_original>
// kernel: tpu_custom_call.1
$region0: #{tpu_custom_call.1}
  #allocation0 [shape = 'u32[]', space=smem, size = 0x4, offset = 0x4, fixed_abs, tag = 'smem constant byte address 0x4 - core index']
  #allocation1 [shape = 'u32[144,128]{1,0:T(1,128)}', space=vmem, size = 0x12000, scoped, tag = 'internal scratch']
  %s0 = inlined_call_operand.hbm [shape: f32[16,128], index: 0, kind: input, shape index: {}]
  %s1 = inlined_call_operand.hbm [shape: f32[16,128], index: 1, kind: output, shape index: {}]
  %s2 = sld [smem:[#allocation0]]
  $region18: #{tpu_custom_call.1} parent=0
    _
  %s4 = ssub.s32 1, %s2
  %s5 = scalar_select 0, %s4, %s2
  $region1: #{tpu_custom_call.1} parent=0
    #allocation2 [shape = 'u8[8192]{0}', space=vmem, size = 0x2000, scoped, tag = 'input window, operand 0, single buffered']
    #allocation3 [shape = 's32[1]{0}', space=sflag, size = 0x4, scoped, tag = 'scoped memory for tpu_custom_call.1']
    #allocation4 [shape = 's32[1]{0}', space=sflag, size = 0x4, scoped, tag = 'scoped memory for tpu_custom_call.1']
    #allocation5 [shape = 'u8[8192]{0}', space=vmem, size = 0x2000, scoped, tag = 'output window, operand 0, single buffered']
    %6 = vsyncpa [#allocation3], 0
    %7 = vsyncpa [#allocation4], 0
    // Predicated region
    $region2: #{tpu_custom_call.1} parent=1 // pred_check
      _
    $region3: #{tpu_custom_call.1} parent=1 // pred_check_branch
      %9 = sbr.rel (0) target = $region5
    $region4: #{tpu_custom_call.1} parent=1 // pred_region
      %s11 = ssub.s32 256, 256
      %12 = vsyncadd [#allocation3], %s11
      %s13 = sshll.u32 [#allocation2], 4
      %s14 = int_to_ptr.vmem [resolvable:$true] %s13
      %19 = dma.hbm_to_vmem [thread:$0]  %s0, 256, %s14, [#allocation3], 128, 128, 8
    $region5: #{tpu_custom_call.1} parent=1 // pred_fallthru
      _
    // Predicated region
    $region6: #{tpu_custom_call.1} parent=1 // pred_check
      _
    $region7: #{tpu_custom_call.1} parent=1 // pred_check_branch
      %21 = sbr.rel (0) target = $region9
    $region8: #{tpu_custom_call.1} parent=1 // pred_region
      %22 = dma.done [#allocation3], 256
    $region9: #{tpu_custom_call.1} parent=1 // pred_fallthru
      _
    %v23 = vld [vmem:[#allocation2] sm:$0xff]
    %v24 = vld [vmem:[#allocation2 + $0x8] sm:$0xff]
    %v25 = vmul.f32 %v23, %v23
    %v26 = vmul.f32 %v24, %v24
    %v27 = vmul.f32 %v25, 0.044715
    %v28 = vmul.f32 %v26, 0.044715
    %v29 = vadd.f32 %v27, 1.0
    %v30 = vadd.f32 %v28, 1.0
    %v31 = vmul.f32 %v23, %v29
    %v32 = vmul.f32 %v24, %v30
    %v33 = vmul.f32 %v31, 0.7978846
    %v34 = vmul.f32 %v32, 0.7978846
    %v35 = vmul.f32 %v23, 0.5
    %v36 = vmul.f32 %v24, 0.5
    %v37 = vtanh.pop %v33
    %v38 = vtanh.pop %v34
    %v39 = vadd.f32 %v37, 1.0
    %v40 = vadd.f32 %v38, 1.0
    %v41 = vmul.f32 %v35, %v39
    %v42 = vmul.f32 %v36, %v40
    %43 = vst [vmem:[#allocation5] sm:$0xff] %v41
    %44 = vst [vmem:[#allocation5 + $0x8] sm:$0xff] %v42
    // Predicated region
    $region10: #{tpu_custom_call.1} parent=1 // pred_check
      _
    $region11: #{tpu_custom_call.1} parent=1 // pred_check_branch
      %46 = sbr.rel (0) target = $region13
    $region12: #{tpu_custom_call.1} parent=1 // pred_region
      %s48 = ssub.s32 256, 256
      %49 = vsyncadd [#allocation4], %s48
      %s50 = sshll.u32 [#allocation5], 4
      %s51 = int_to_ptr.vmem [resolvable:$true] %s50
      %56 = dma.vmem_to_hbm [thread:$0]  %s51, 256, %s1, [#allocation4], 128, 128, 8
    $region13: #{tpu_custom_call.1} parent=1 // pred_fallthru
      _
    // Predicated region
    $region14: #{tpu_custom_call.1} parent=1 // pred_check
      _
    $region15: #{tpu_custom_call.1} parent=1 // pred_check_branch
      %58 = sbr.rel (0) target = $region17
    $region16: #{tpu_custom_call.1} parent=1 // pred_region
      %59 = dma.done [#allocation4], 256
    $region17: #{tpu_custom_call.1} parent=1 // pred_fallthru
      _
    %60 = vsyncpa [#allocation3], 1
    %61 = vsyncpa [#allocation4], 1

</llo_original>
